<compile_context>
chip_gen: v5e
topology: v5e:2x2
jax: 0.10.0
libtpu: 0.0.40
codegen_flags: <defaults>
</compile_context>

<pallas_src>
import functools

import jax
import jax.numpy as jnp
from jax.experimental import pallas as pl
from jax.experimental.pallas import tpu as pltpu


def _largest_divisor_at_most(n: int, target: int) -> int:
    """Largest divisor of `n` that is <= target (>= 1)."""
    t = max(1, min(n, target))
    while n % t:
        t -= 1
    return t


def _pick_lane_tile(dim: int, target: int, quantum: int = 128) -> int:
    """Largest multiple of `quantum` dividing `dim` that is <= target.

    Falls back to the full extent (always a legal block) when no such
    multiple exists, keeping every block (8,128)-safe.
    """
    t = (min(dim, target) // quantum) * quantum
    while t >= quantum:
        if dim % t == 0:
            return t
        t -= quantum
    return dim


# ---------------------------------------------------------------------------
# "avg" pooling: masked mean over the sequence axis
# ---------------------------------------------------------------------------
def _avg_kernel(w_ref, x_ref, o_ref, acc_ref):
    # w_ref:   (TB, TS)     f32   (mask already folded with 1/denominator)
    # x_ref:   (TB, TS, TH) x.dtype
    # o_ref:   (TB, TH)     x.dtype
    # acc_ref: (TB, TH)     f32   (VMEM scratch, lives across the S axis)
    s = pl.program_id(2)

    @pl.when(s == 0)
    def _():
        acc_ref[...] = jnp.zeros_like(acc_ref)

    # bf16/f32 x promotes against the f32 weights -> f32 accumulate.
    acc_ref[...] += jnp.sum(x_ref[...] * w_ref[...][:, :, None], axis=1)

    @pl.when(s == pl.num_programs(2) - 1)
    def _():
        o_ref[...] = acc_ref[...].astype(o_ref.dtype)


def _pooling_avg(x, mask):
    B, S, H = x.shape
    # Fold mask and 1/(mask.sum + eps) into a single f32 weights array:
    #   out[b, h] = sum_s x[b, s, h] * w[b, s]
    denom = jnp.sum(mask, axis=1, keepdims=True).astype(jnp.float32) + 1e-9
    w = mask.astype(jnp.float32) / denom                       # [B, S] f32

    itemsize = jnp.dtype(x.dtype).itemsize
    # (8,128)-safe tiles targeting ~8 MiB x blocks (f32 and bf16 alike).
    TB = _largest_divisor_at_most(B, 8)
    TS = _pick_lane_tile(S, 512)
    TH = _pick_lane_tile(H, 1024 if itemsize <= 2 else 512)

    # Keep at least 2 blocks on a "parallel" axis so v7x's two TensorCores
    # both get work, when H allows a 128-aligned split.
    if B // TB == 1 and H // TH == 1:
        th2 = _pick_lane_tile(H, H // 2)
        if th2 < H and th2 >= 128:
            TH = th2

    grid = (B // TB, H // TH, S // TS)

    # Explicit scoped-VMEM budget: double-buffered blocks + accumulator +
    # margin, never below 32 MiB (v5e default is only 16 MiB) and never above
    # 64 MiB (v7x physical VMEM per TensorCore).
    x_block = TB * TS * TH * itemsize
    w_block = TB * TS * 4
    o_block = TB * TH * itemsize
    acc_block = TB * TH * 4
    est = 2 * (x_block + w_block + o_block) + acc_block + (2 << 20)
    vmem_limit = int(min(max(est, 32 << 20), 64 << 20))

    return pl.pallas_call(
        _avg_kernel,
        out_shape=jax.ShapeDtypeStruct((B, H), x.dtype),
        grid_spec=pltpu.PrefetchScalarGridSpec(
            num_scalar_prefetch=0,
            grid=grid,
            in_specs=[
                pl.BlockSpec((TB, TS), lambda b, h, s: (b, s)),
                pl.BlockSpec((TB, TS, TH), lambda b, h, s: (b, s, h)),
            ],
            out_specs=pl.BlockSpec((TB, TH), lambda b, h, s: (b, h)),
            scratch_shapes=[pltpu.VMEM((TB, TH), jnp.float32)],
        ),
        compiler_params=pltpu.CompilerParams(
            dimension_semantics=("parallel", "parallel", "arbitrary"),
            vmem_limit_bytes=vmem_limit),
    )(w, x)


# ---------------------------------------------------------------------------
# Row-selection pooling: cls / last / cls__left / last__right
# ---------------------------------------------------------------------------
def _select_kernel(idx_ref, gate_ref, x_ref, o_ref):
    # idx_ref:  (B,)        int32 in SMEM (scalar prefetch; used by index maps)
    # gate_ref: (TB, 1)     x.dtype  -- mask value at the selected row
    # x_ref:    (TB, 1, H)  x.dtype  -- the gathered rows
    # o_ref:    (TB, H)     x.dtype
    del idx_ref
    o_ref[...] = (x_ref[:, 0, :] * gate_ref[...]).astype(o_ref.dtype)


def _pooling_select(x, mask, idx, batch_uniform):
    B, S, H = x.shape
    # masked_fill gate for the selected row, precomputed as a [B, 1] scalar.
    gate = jnp.take_along_axis(mask, idx[:, None], axis=1).astype(x.dtype)

    # Uniform-index modes ('cls'/'last') can group batch rows per grid step;
    # data-dependent modes gather one row per step.
    TB = _largest_divisor_at_most(B, 8) if batch_uniform else 1

    return pl.pallas_call(
        _select_kernel,
        out_shape=jax.ShapeDtypeStruct((B, H), x.dtype),
        grid_spec=pltpu.PrefetchScalarGridSpec(
            num_scalar_prefetch=1,
            grid=(B // TB,),
            in_specs=[
                pl.BlockSpec((TB, 1), lambda b, idx: (b, 0)),
                # Block size 1 along S => the returned block index IS the
                # element row index, so only a (TB, 1, H) slab is DMA'd.
                pl.BlockSpec((TB, 1, H), lambda b, idx: (b, idx[b * TB], 0)),
            ],
            out_specs=pl.BlockSpec((TB, H), lambda b, idx: (b, 0)),
        ),
        compiler_params=pltpu.CompilerParams(
            dimension_semantics=("parallel",)),
    )(idx, gate, x)


# ---------------------------------------------------------------------------
# Public wrapper (mirrors Pooling.forward)
# ---------------------------------------------------------------------------
@functools.partial(jax.jit, static_argnames=("pooling_mode",))
def pooling(last_hidden_states: jax.Array,
            attention_mask: jax.Array,
            pooling_mode: str) -> jax.Array:
    """Pallas equivalent of Pooling.forward.

    last_hidden_states: [B, S, H] float
    attention_mask:     [B, S]    int (0/1)
    returns:            [B, H]    same dtype as last_hidden_states
    """
    B, S, H = last_hidden_states.shape
    mask = attention_mask.astype(jnp.int32)

    if pooling_mode == "avg":
        return _pooling_avg(last_hidden_states, mask)

    if pooling_mode == "cls":
        idx = jnp.zeros((B,), dtype=jnp.int32)
        uniform = True
    elif pooling_mode == "last":
        idx = jnp.full((B,), S - 1, dtype=jnp.int32)
        uniform = True
    elif pooling_mode == "cls__left":
        idx = jnp.sum(1 - mask, axis=1).astype(jnp.int32)
        uniform = False
    elif pooling_mode == "last__right":
        idx = (jnp.sum(mask, axis=1) - 1).astype(jnp.int32)
        uniform = False
    else:
        raise ValueError(f"pool_type {pooling_mode} not supported")

    # Guard fully-padded / fully-valid degenerate rows (idx would be S or -1);
    # the gate (mask at the selected row) is 0 there, so the output is 0.
    idx = jnp.clip(idx, 0, S - 1)
    return _pooling_select(last_hidden_states, mask, idx, uniform)


# ---------------------------------------------------------------------------
# Pure-JAX reference mirroring the PyTorch module
# ---------------------------------------------------------------------------
def pooling_ref(last_hidden_states, attention_mask, pooling_mode):
    mask = attention_mask.astype(jnp.bool_)
    last_hidden = jnp.where(mask[..., None], last_hidden_states, 0.0)
    if pooling_mode == "avg":
        return last_hidden.sum(axis=1) / (
            attention_mask.sum(axis=1)[..., None].astype(jnp.float32) + 1e-9)
    if pooling_mode == "cls":
        return last_hidden[:, 0]
    if pooling_mode == "cls__left":
        seq_idxs = (1 - attention_mask).sum(axis=1).astype(jnp.int32)
        return last_hidden[jnp.arange(last_hidden.shape[0]), seq_idxs]
    if pooling_mode == "last":
        return last_hidden[:, -1]
    if pooling_mode == "last__right":
        seq_lens = (attention_mask.sum(axis=1) - 1).astype(jnp.int32)
        return last_hidden[jnp.arange(last_hidden.shape[0]), seq_lens]
    raise ValueError(pooling_mode)


if __name__ == "__main__":
    B, S, H = 2, 8, 32
    key = jax.random.PRNGKey(0)
    kx, _ = jax.random.split(key)
    x = jax.random.normal(kx, (B, S, H), dtype=jnp.float32)

    # batch 0: right-padded (valid first 5), batch 1: left-padded (valid last 6)
    attention_mask = jnp.array(
        [[1, 1, 1, 1, 1, 0, 0, 0],
         [0, 0, 1, 1, 1, 1, 1, 1]], dtype=jnp.int32)

    ok = True
    for mode in ("avg", "cls", "cls__left", "last", "last__right"):
        out = jax.block_until_ready(pooling(x, attention_mask, mode))
        ref = pooling_ref(x, attention_mask, mode)
        if out.shape != (B, H) or not jnp.allclose(out, ref, atol=1e-5, rtol=1e-5):
            ok = False
            print(f"MISMATCH for mode={mode}")

    if ok:
        print("KERNEL_OK")
</pallas_src>

<mosaic_0001>
module attributes {stable_mosaic.version = 11 : i64} {
  func.func @_avg_kernel(%arg0: i32, %arg1: i32, %arg2: i32, %arg3: memref<2x8xf32, #tpu.memory_space<vmem>>, %arg4: memref<2x8x32xf32, #tpu.memory_space<vmem>>, %arg5: memref<2x32xf32, #tpu.memory_space<vmem>>, %arg6: memref<2x32xf32, #tpu.memory_space<vmem>>) attributes {dimension_semantics = [#tpu.dimension_semantics<parallel>, #tpu.dimension_semantics<parallel>, #tpu.dimension_semantics<arbitrary>], iteration_bounds = array<i64: 1, 1, 1>, scalar_prefetch = 0 : i64, scratch_operands = 1 : i64, tpu.core_type = #tpu.core_type<tc>, window_params = [{transform_indices = @transform_0, window_bounds = array<i64: 2, 8>}, {transform_indices = @transform_1, window_bounds = array<i64: 2, 8, 32>}, {transform_indices = @transform_2, window_bounds = array<i64: 2, 32>}]} {
    %c0_i32 = arith.constant 0 : i32
    %0 = arith.cmpi eq, %arg2, %c0_i32 : i32
    %1 = arith.extui %0 : i1 to i32
    %c0_i32_0 = arith.constant 0 : i32
    %2 = arith.cmpi ne, %1, %c0_i32_0 : i32
    scf.if %2 {
      %cst_11 = arith.constant 0.000000e+00 : f32
      %15 = vector.broadcast %cst_11 : f32 to vector<2x32xf32>
      %c0_12 = arith.constant 0 : index
      %c0_13 = arith.constant 0 : index
      %16 = vector.load %arg6[%c0_12, %c0_13] : memref<2x32xf32, #tpu.memory_space<vmem>>, vector<2x32xf32>
      tpu.vector_store %arg6[%c0_12, %c0_13], %15 {strides = array<i32>} : memref<2x32xf32, #tpu.memory_space<vmem>>, vector<2x32xf32>,
    } else {
    }
    %c0 = arith.constant 0 : index
    %c0_1 = arith.constant 0 : index
    %3 = vector.load %arg6[%c0, %c0_1] : memref<2x32xf32, #tpu.memory_space<vmem>>, vector<2x32xf32>
    %c0_2 = arith.constant 0 : index
    %c0_3 = arith.constant 0 : index
    %c0_4 = arith.constant 0 : index
    %4 = vector.load %arg4[%c0_2, %c0_3, %c0_4] : memref<2x8x32xf32, #tpu.memory_space<vmem>>, vector<2x8x32xf32>
    %c0_5 = arith.constant 0 : index
    %c0_6 = arith.constant 0 : index
    %5 = vector.load %arg3[%c0_5, %c0_6] : memref<2x8xf32, #tpu.memory_space<vmem>>, vector<2x8xf32>
    %6 = vector.shape_cast %5 : vector<2x8xf32> to vector<2x8x1xf32>
    %7 = vector.broadcast %6 : vector<2x8x1xf32> to vector<2x8x32xf32>
    %8 = arith.mulf %4, %7 : vector<2x8x32xf32>
    %cst = arith.constant dense<0.000000e+00> : vector<2x32xf32>
    %9 = vector.multi_reduction <add>, %8, %cst [1] : vector<2x8x32xf32> to vector<2x32xf32>
    %10 = arith.addf %3, %9 : vector<2x32xf32>
    %c0_7 = arith.constant 0 : index
    %c0_8 = arith.constant 0 : index
    %11 = vector.load %arg6[%c0_7, %c0_8] : memref<2x32xf32, #tpu.memory_space<vmem>>, vector<2x32xf32>
    tpu.vector_store %arg6[%c0_7, %c0_8], %10 {strides = array<i32>} : memref<2x32xf32, #tpu.memory_space<vmem>>, vector<2x32xf32>,
    %c0_i32_9 = arith.constant 0 : i32
    %12 = arith.cmpi eq, %arg2, %c0_i32_9 : i32
    %13 = arith.extui %12 : i1 to i32
    %c0_i32_10 = arith.constant 0 : i32
    %14 = arith.cmpi ne, %13, %c0_i32_10 : i32
    scf.if %14 {
      %c0_11 = arith.constant 0 : index
      %c0_12 = arith.constant 0 : index
      %15 = vector.load %arg6[%c0_11, %c0_12] : memref<2x32xf32, #tpu.memory_space<vmem>>, vector<2x32xf32>
      %c0_13 = arith.constant 0 : index
      %c0_14 = arith.constant 0 : index
      %16 = vector.load %arg5[%c0_13, %c0_14] : memref<2x32xf32, #tpu.memory_space<vmem>>, vector<2x32xf32>
      tpu.vector_store %arg5[%c0_13, %c0_14], %15 {strides = array<i32>} : memref<2x32xf32, #tpu.memory_space<vmem>>, vector<2x32xf32>,
    } else {
    }
    return
  }
  func.func @transform_0(%arg0: i32, %arg1: i32, %arg2: i32) -> (i32, i32) {
    %c0_i32 = arith.constant 0 : i32
    return %arg0, %arg2 : i32, i32
  }
  func.func @transform_1(%arg0: i32, %arg1: i32, %arg2: i32) -> (i32, i32, i32) {
    %c0_i32 = arith.constant 0 : i32
    return %arg0, %arg2, %arg1 : i32, i32, i32
  }
  func.func @transform_2(%arg0: i32, %arg1: i32, %arg2: i32) -> (i32, i32) {
    %c0_i32 = arith.constant 0 : i32
    return %arg0, %arg1 : i32, i32
  }
}

</mosaic_0001>

<llo_original>
// kernel: pooling.1
$region0: #{pooling.1}
  #allocation0 [shape = 'u32[]', space=smem, size = 0x4, offset = 0x4, fixed_abs, tag = 'smem constant byte address 0x4 - core index']
  #allocation1 [shape = 'u32[72,128]{1,0:T(1,128)}', space=vmem, size = 0x9000, scoped, tag = 'internal scratch']
  #allocation2 [shape = 'f32[2,32]{1,0:T(2,128)}', space=vmem, size = 0x400, scoped, tag = 'scratch operand']
  %s0 = inlined_call_operand.vmem [shape: f32[2,8], index: 0, kind: input, shape index: {}]
  %s1 = inlined_call_operand.hbm [shape: f32[2,8,32], index: 1, kind: input, shape index: {}]
  %s2 = inlined_call_operand.hbm [shape: f32[2,32], index: 2, kind: output, shape index: {}]
  %s3 = sld [smem:[#allocation0]]
  $region30: #{pooling.1} parent=0
    _
  %s5 = ssub.s32 1, %s3
  %s6 = scalar_select 0, %s5, %s3
  $region1: #{pooling.1} parent=0
    #allocation3 [shape = 'u8[8192]{0}', space=vmem, size = 0x2000, scoped, tag = 'input window, operand 1, single buffered']
    #allocation4 [shape = 's32[1]{0}', space=sflag, size = 0x4, scoped, tag = 'scoped memory for pooling.1']
    #allocation5 [shape = 's32[1]{0}', space=sflag, size = 0x4, scoped, tag = 'scoped memory for pooling.1']
    #allocation6 [shape = 'u8[1024]{0}', space=vmem, size = 0x400, scoped, tag = 'output window, operand 0, single buffered']
    %7 = vsyncpa [#allocation4], 0
    %8 = vsyncpa [#allocation5], 0
    // Predicated region
    $region2: #{pooling.1} parent=1 // pred_check
      _
    $region3: #{pooling.1} parent=1 // pred_check_branch
      %10 = sbr.rel (0) target = $region5
    $region4: #{pooling.1} parent=1 // pred_region
      _
    $region5: #{pooling.1} parent=1 // pred_fallthru
      _
    // Predicated region
    $region6: #{pooling.1} parent=1 // pred_check
      _
    $region7: #{pooling.1} parent=1 // pred_check_branch
      %12 = sbr.rel (0) target = $region9
    $region8: #{pooling.1} parent=1 // pred_region
      %14 = vsyncadd [#allocation4], 0
      %s15 = sshll.u32 %s1, 4
      %s16 = int_to_ptr.hbm [resolvable:$true] %s15
      %s17 = sshll.u32 [#allocation3], 4
      %s18 = int_to_ptr.vmem [resolvable:$true] %s17
      %23 = dma.hbm_to_vmem [thread:$0]  %s16, 256, %s18, [#allocation4], 128, 128, 8
    $region9: #{pooling.1} parent=1 // pred_fallthru
      _
    // Predicated region
    $region10: #{pooling.1} parent=1 // pred_check
      _
    $region11: #{pooling.1} parent=1 // pred_check_branch
      %25 = sbr.rel (0) target = $region13
    $region12: #{pooling.1} parent=1 // pred_region
      %27 = dma.done [#allocation4], 256
    $region13: #{pooling.1} parent=1 // pred_fallthru
      _
    %p28 = scmp.eq.s32.totalorder 0, 0
    // Predicated region
    $region14: #{pooling.1} parent=1 // pred_check
      %p29 = pneg %p28
    $region15: #{pooling.1} parent=1 // pred_check_branch
      %31 = sbr.rel (%p29) target = $region17
    $region16: #{pooling.1} parent=1 // pred_region
      %vm32 = vcmask 254976
      %33 = vst.msk [vmem:[#allocation2] sm:$0x3] %vm32, 0.0
    $region17: #{pooling.1} parent=1 // pred_fallthru
      _
    %v34 = vld [vmem:[#allocation2] sm:$0x3]
    %v35 = vld [vmem:[#allocation3] sm:$0xff]
    %v36 = vld [vmem:[#allocation3 + $0x8] sm:$0xff]
    %v37 = vld [vmem:[%s0] sm:$0x3]
    %v38 = vperm.slane %v37, 0
    %v39 = vlaneseq
    %v40 = vshrl.u32 %v39, 7
    %42 = vset.pattern.permute.xlu0 %v40
    %43 = vperm.xlu0 %42, %v38
    %v44 = vpop.permute.xlu0 %43
    %v45 = vperm.slane %v37, 1
    %v46 = vlaneseq
    %v47 = vshrl.u32 %v46, 7
    %49 = vset.pattern.permute.xlu0 %v47
    %50 = vperm.xlu0 %49, %v45
    %v51 = vpop.permute.xlu0 %50
    %v52 = vmul.f32 %v35, %v44
    %v53 = vmul.f32 %v36, %v51
    %vm54 = vcmask 261120
    %v55 = vsel %vm54, %v52, 0.0
    %v56 = vrot.slane %v55, 4
    %v57 = vadd.f32 %v55, %v56
    %v58 = vrot.slane %v57, 2
    %v59 = vadd.f32 %v57, %v58
    %v60 = vrot.slane %v59, 1
    %v61 = vadd.f32 %v59, %v60
    %v62 = vsel %vm54, %v53, 0.0
    %v63 = vrot.slane %v62, 4
    %v64 = vadd.f32 %v62, %v63
    %v65 = vrot.slane %v64, 2
    %v66 = vadd.f32 %v64, %v65
    %v67 = vrot.slane %v66, 1
    %v68 = vadd.f32 %v66, %v67
    %vm71 = vcmask 1041409
    %v72 = vsel %vm71, %v68, %v61
    %v74 = vadd.f32 %v34, %v72
    %vm75 = vcmask 254976
    %76 = vst.msk [vmem:[#allocation2] sm:$0x3] %vm75, %v74
    // Predicated region
    $region18: #{pooling.1} parent=1 // pred_check
      %p77 = pneg %p28
    $region19: #{pooling.1} parent=1 // pred_check_branch
      %79 = sbr.rel (%p77) target = $region21
    $region20: #{pooling.1} parent=1 // pred_region
      %v80 = vld [vmem:[#allocation2] sm:$0x3]
      %81 = vst.msk [vmem:[#allocation6] sm:$0x3] %vm75, %v80
    $region21: #{pooling.1} parent=1 // pred_fallthru
      _
    // Predicated region
    $region22: #{pooling.1} parent=1 // pred_check
      _
    $region23: #{pooling.1} parent=1 // pred_check_branch
      %83 = sbr.rel (0) target = $region25
    $region24: #{pooling.1} parent=1 // pred_region
      %85 = vsyncadd [#allocation5], 0
      %s87 = sshll.u32 [#allocation6], 4
      %s88 = int_to_ptr.vmem [resolvable:$true] %s87
      %s89 = sshll.u32 %s2, 4
      %s90 = int_to_ptr.hbm [resolvable:$true] %s89
      %92 = dma.vmem_to_hbm [thread:$0]  %s88, 32, %s90, [#allocation5]
    $region25: #{pooling.1} parent=1 // pred_fallthru
      _
    // Predicated region
    $region26: #{pooling.1} parent=1 // pred_check
      _
    $region27: #{pooling.1} parent=1 // pred_check_branch
      %94 = sbr.rel (0) target = $region29
    $region28: #{pooling.1} parent=1 // pred_region
      %96 = dma.done [#allocation5], 32
    $region29: #{pooling.1} parent=1 // pred_fallthru
      _
    %97 = vsyncpa [#allocation4], 1
    %98 = vsyncpa [#allocation5], 1

</llo_original>
